<compile_context>
chip_gen: v5e
topology: v5e:2x2
jax: 0.10.0
libtpu: 0.0.40
codegen_flags: <defaults>
</compile_context>

<pallas_src>
import jax
import jax.numpy as jnp
from jax.experimental import pallas as pl
from jax.experimental.pallas import tpu as pltpu

_LANE = 128
_VMEM_CAP_BYTES = 48 * 1024 * 1024   # headroom under v7x's 64 MiB physical VMEM
_DEFAULT_BLOCK_ROWS = 2048
_MIN_ROWS_PER_CORE = 512


def _round_up(x, m):
    return ((x + m - 1) // m) * m


def _tensorcores_per_chip():
    """Best-effort detection of TensorCores sharing one chip (megacore). Safe default: 1."""
    try:
        dev = jax.devices()[0]
        for attr in ("num_cores", "core_count"):
            v = getattr(dev, attr, None)
            if isinstance(v, int) and 1 <= v <= 8:
                return v
    except Exception:
        pass
    try:
        info = pltpu.get_tpu_info()
        for attr in ("num_cores", "num_tensorcores", "tensorcore_count"):
            v = getattr(info, attr, None)
            if isinstance(v, int) and 1 <= v <= 8:
                return v
    except Exception:
        pass
    return 1


def _decoder_kernel(x_ref, w1_ref, b1_ref, w2_ref, b2_ref, o_ref):
    # fc1 on the MXU with f32 accumulation; bias + ReLU on the VPU in f32.
    h = jnp.dot(x_ref[...], w1_ref[...], preferred_element_type=jnp.float32)
    h = jnp.maximum(h + b1_ref[...], 0.0)
    # fc2: cast the f32 intermediate to the weight dtype only at the MXU boundary.
    y = jnp.dot(h.astype(w2_ref.dtype), w2_ref[...],
                preferred_element_type=jnp.float32)
    o_ref[...] = (y + b2_ref[...]).astype(o_ref.dtype)


def protein_decoder(x, w1, b1, w2, b2, *, block_rows=None):
    """x: (..., C_in); w1: (C_in, C_hid); b1: (C_hid,); w2: (C_hid, C_out); b2: (C_out,)."""
    orig_shape = x.shape
    c_in = orig_shape[-1]
    if x.ndim != 2:
        x = x.reshape(-1, c_in)
    n = x.shape[0]
    c_hid = w1.shape[1]
    c_out = w2.shape[1]
    assert w1.shape[0] == c_in and w2.shape[0] == c_hid
    assert b1.shape == (c_hid,) and b2.shape == (c_out,)

    itemsize = jnp.dtype(x.dtype).itemsize
    sublane = max(8, 32 // itemsize)          # f32 -> 8 rows, bf16 -> 16 rows

    # --- VMEM footprint estimate (uses lane-padded widths: Mosaic pads in VMEM) ---
    c_in_v, c_hid_v, c_out_v = (_round_up(c, _LANE) for c in (c_in, c_hid, c_out))
    weight_vmem = 2 * (c_in_v * c_hid_v + c_hid_v * c_out_v + c_hid_v + c_out_v) * itemsize
    per_row_vmem = (2 * c_in_v + 2 * c_out_v) * itemsize + c_hid_v * 4  # x/out dbl-buf + f32 h
    budget = int(0.8 * _VMEM_CAP_BYTES)

    # --- choose block_rows -------------------------------------------------------
    if block_rows is None:
        block_rows = _DEFAULT_BLOCK_ROWS
        while block_rows > sublane and weight_vmem + block_rows * per_row_vmem > budget:
            block_rows //= 2
        # Multi-TensorCore parts only: cap the tile so the "parallel" row axis
        # actually shards across cores, but never below ~512 rows per core.
        n_tc = _tensorcores_per_chip()
        if n_tc > 1 and n >= n_tc * _MIN_ROWS_PER_CORE:
            block_rows = min(block_rows, _round_up(-(-n // n_tc), sublane))
    block_rows = max(sublane, (int(block_rows) // sublane) * sublane)
    if block_rows >= n:
        block_rows = n    # one full block; "block dim == array dim" is always legal
    grid_rows = pl.cdiv(n, block_rows)

    # Biases as 2-D (1, C) rows so they broadcast inside the kernel.
    b1_2d = b1.reshape(1, c_hid)
    b2_2d = b2.reshape(1, c_out)

    vmem_estimate = weight_vmem + block_rows * per_row_vmem
    vmem_limit = int(min(_VMEM_CAP_BYTES, max(2 * vmem_estimate, 32 * 1024 * 1024)))

    # True (unpadded) HBM traffic and flops — keeps XLA's scheduler honest.
    cost = pl.CostEstimate(
        flops=2 * n * (c_in * c_hid + c_hid * c_out),
        transcendentals=0,
        bytes_accessed=itemsize * (n * c_in + c_in * c_hid + c_hid
                                   + c_hid * c_out + c_out + n * c_out),
    )

    out = pl.pallas_call(
        _decoder_kernel,
        out_shape=jax.ShapeDtypeStruct((n, c_out), x.dtype),
        grid=(grid_rows,),
        in_specs=[
            # x: tiled over rows (last dim = full c_in, unpadded in HBM).
            pl.BlockSpec((block_rows, c_in), lambda i: (i, 0)),
            # grid-invariant weights / biases: full blocks, fetched once.
            pl.BlockSpec((c_in, c_hid), lambda i: (0, 0)),
            pl.BlockSpec((1, c_hid), lambda i: (0, 0)),
            pl.BlockSpec((c_hid, c_out), lambda i: (0, 0)),
            pl.BlockSpec((1, c_out), lambda i: (0, 0)),
        ],
        out_specs=pl.BlockSpec((block_rows, c_out), lambda i: (i, 0)),
        compiler_params=pltpu.CompilerParams(
            dimension_semantics=("parallel",),
            vmem_limit_bytes=vmem_limit,
        ),
        cost_estimate=cost,
    )(x, w1, b1_2d, w2, b2_2d)

    if len(orig_shape) != 2:
        out = out.reshape(*orig_shape[:-1], c_out)
    return out

    # TODO(synk): if c_in/c_hid ever become multi-thousand, add a K grid axis
    # ("arbitrary", last) with an f32 VMEM accumulator instead of requiring the
    # full weight blocks resident.


def _init_params(key, in_channels, hidden_channels, out_channels, dtype=jnp.float32):
    # Deterministic synthetic init; shapes match nn.Linear(in, hid), nn.Linear(hid, out)
    # stored pre-transposed as (in, hid) / (hid, out).
    k1, k2, k3, k4 = jax.random.split(key, 4)
    w1 = jax.random.normal(k1, (in_channels, hidden_channels), dtype) * 0.1
    b1 = jax.random.normal(k2, (hidden_channels,), dtype) * 0.1
    w2 = jax.random.normal(k3, (hidden_channels, out_channels), dtype) * 0.1
    b2 = jax.random.normal(k4, (out_channels,), dtype) * 0.1
    return w1, b1, w2, b2


def _reference(x, w1, b1, w2, b2):
    h = jnp.maximum(x @ w1 + b1, 0.0)
    return h @ w2 + b2


if __name__ == "__main__":
    # Small shapes consistent with the module's forward: (batch, in_channels).
    batch, in_channels, hidden_channels, out_channels = 8, 32, 64, 16

    key = jax.random.PRNGKey(0)
    kx, kp, kx2 = jax.random.split(key, 3)
    x = jax.random.normal(kx, (batch, in_channels), jnp.float32)
    w1, b1, w2, b2 = _init_params(kp, in_channels, hidden_channels, out_channels)

    # Loose-ish tolerance: Pallas MXU f32 matmuls and XLA's reference matmul may
    # take different bf16-pass precision paths; semantic bugs are still >> 2e-2.
    out = jax.block_until_ready(protein_decoder(x, w1, b1, w2, b2))
    ref = _reference(x, w1, b1, w2, b2)
    assert out.shape == (batch, out_channels)
    assert jnp.allclose(out, ref, atol=2e-2, rtol=2e-2), "mismatch vs reference (small)"

    # Second check: batch not a multiple of the tile with a forced multi-step
    # grid -> exercises the ragged final block (masked output writes), the
    # pipelined "parallel" row axis, and grid-invariant weight reuse.
    x2 = jax.random.normal(kx2, (1000, in_channels), jnp.float32)
    out2 = jax.block_until_ready(protein_decoder(x2, w1, b1, w2, b2, block_rows=256))
    ref2 = _reference(x2, w1, b1, w2, b2)
    assert out2.shape == (1000, out_channels)
    assert jnp.allclose(out2, ref2, atol=2e-2, rtol=2e-2), "mismatch vs reference (tiled)"

    print("KERNEL_OK")
</pallas_src>

<mosaic_0001>
module attributes {stable_mosaic.version = 11 : i64} {
  func.func @_decoder_kernel(%arg0: i32, %arg1: memref<8x32xf32, #tpu.memory_space<vmem>>, %arg2: memref<32x64xf32, #tpu.memory_space<vmem>>, %arg3: memref<1x64xf32, #tpu.memory_space<vmem>>, %arg4: memref<64x16xf32, #tpu.memory_space<vmem>>, %arg5: memref<1x16xf32, #tpu.memory_space<vmem>>, %arg6: memref<8x16xf32, #tpu.memory_space<vmem>>) attributes {dimension_semantics = [#tpu.dimension_semantics<parallel>], iteration_bounds = array<i64: 1>, scalar_prefetch = 0 : i64, scratch_operands = 0 : i64, tpu.core_type = #tpu.core_type<tc>, window_params = [{transform_indices = @transform_0, window_bounds = array<i64: 8, 32>}, {pipeline_mode = #tpu.pipeline_mode<synchronous>, transform_indices = @transform_1, window_bounds = array<i64: 32, 64>}, {pipeline_mode = #tpu.pipeline_mode<synchronous>, transform_indices = @transform_2, window_bounds = array<i64: 1, 64>}, {pipeline_mode = #tpu.pipeline_mode<synchronous>, transform_indices = @transform_3, window_bounds = array<i64: 64, 16>}, {pipeline_mode = #tpu.pipeline_mode<synchronous>, transform_indices = @transform_4, window_bounds = array<i64: 1, 16>}, {transform_indices = @transform_5, window_bounds = array<i64: 8, 16>}]} {
    %c0 = arith.constant 0 : index
    %c0_0 = arith.constant 0 : index
    %0 = vector.load %arg1[%c0, %c0_0] : memref<8x32xf32, #tpu.memory_space<vmem>>, vector<8x32xf32>
    %c0_1 = arith.constant 0 : index
    %c0_2 = arith.constant 0 : index
    %1 = vector.load %arg2[%c0_1, %c0_2] : memref<32x64xf32, #tpu.memory_space<vmem>>, vector<32x64xf32>
    %cst = arith.constant dense<0.000000e+00> : vector<8x64xf32>
    %2 = tpu.matmul %0, %1, %cst {dimension_numbers = #tpu.dot_dimension_numbers<[1], [0], [0], [1], [0, 0, 1, 1], [], []>} : vector<8x32xf32>, vector<32x64xf32>, vector<8x64xf32> -> vector<8x64xf32>
    %c0_3 = arith.constant 0 : index
    %c0_4 = arith.constant 0 : index
    %3 = vector.load %arg3[%c0_3, %c0_4] : memref<1x64xf32, #tpu.memory_space<vmem>>, vector<1x64xf32>
    %4 = vector.broadcast %3 : vector<1x64xf32> to vector<8x64xf32>
    %5 = arith.addf %2, %4 : vector<8x64xf32>
    %cst_5 = arith.constant 0.000000e+00 : f32
    %6 = vector.broadcast %cst_5 : f32 to vector<8x64xf32>
    %7 = arith.maximumf %5, %6 : vector<8x64xf32>
    %c0_6 = arith.constant 0 : index
    %c0_7 = arith.constant 0 : index
    %8 = vector.load %arg4[%c0_6, %c0_7] : memref<64x16xf32, #tpu.memory_space<vmem>>, vector<64x16xf32>
    %cst_8 = arith.constant dense<0.000000e+00> : vector<8x16xf32>
    %9 = tpu.matmul %7, %8, %cst_8 {dimension_numbers = #tpu.dot_dimension_numbers<[1], [0], [0], [1], [0, 0, 1, 1], [], []>} : vector<8x64xf32>, vector<64x16xf32>, vector<8x16xf32> -> vector<8x16xf32>
    %c0_9 = arith.constant 0 : index
    %c0_10 = arith.constant 0 : index
    %10 = vector.load %arg5[%c0_9, %c0_10] : memref<1x16xf32, #tpu.memory_space<vmem>>, vector<1x16xf32>
    %11 = vector.broadcast %10 : vector<1x16xf32> to vector<8x16xf32>
    %12 = arith.addf %9, %11 : vector<8x16xf32>
    %c0_11 = arith.constant 0 : index
    %c0_12 = arith.constant 0 : index
    %13 = vector.load %arg6[%c0_11, %c0_12] : memref<8x16xf32, #tpu.memory_space<vmem>>, vector<8x16xf32>
    tpu.vector_store %arg6[%c0_11, %c0_12], %12 {strides = array<i32>} : memref<8x16xf32, #tpu.memory_space<vmem>>, vector<8x16xf32>,
    return
  }
  func.func @transform_0(%arg0: i32) -> (i32, i32) {
    %c0_i32 = arith.constant 0 : i32
    %c0_i32_0 = arith.constant 0 : i32
    return %arg0, %c0_i32 : i32, i32
  }
  func.func @transform_1(%arg0: i32) -> (i32, i32) {
    %c0_i32 = arith.constant 0 : i32
    %c0_i32_0 = arith.constant 0 : i32
    %c0_i32_1 = arith.constant 0 : i32
    return %c0_i32, %c0_i32_0 : i32, i32
  }
  func.func @transform_2(%arg0: i32) -> (i32, i32) {
    %c0_i32 = arith.constant 0 : i32
    %c0_i32_0 = arith.constant 0 : i32
    %c0_i32_1 = arith.constant 0 : i32
    return %c0_i32, %c0_i32_0 : i32, i32
  }
  func.func @transform_3(%arg0: i32) -> (i32, i32) {
    %c0_i32 = arith.constant 0 : i32
    %c0_i32_0 = arith.constant 0 : i32
    %c0_i32_1 = arith.constant 0 : i32
    return %c0_i32, %c0_i32_0 : i32, i32
  }
  func.func @transform_4(%arg0: i32) -> (i32, i32) {
    %c0_i32 = arith.constant 0 : i32
    %c0_i32_0 = arith.constant 0 : i32
    %c0_i32_1 = arith.constant 0 : i32
    return %c0_i32, %c0_i32_0 : i32, i32
  }
  func.func @transform_5(%arg0: i32) -> (i32, i32) {
    %c0_i32 = arith.constant 0 : i32
    %c0_i32_0 = arith.constant 0 : i32
    return %arg0, %c0_i32 : i32, i32
  }
}

</mosaic_0001>

<llo_original>
// kernel: tpu_custom_call.1
$region0: #{tpu_custom_call.1}
  #allocation0 [shape = 'u32[]', space=smem, size = 0x4, offset = 0x4, fixed_abs, tag = 'smem constant byte address 0x4 - core index']
  #allocation1 [shape = 'u32[72,128]{1,0:T(1,128)}', space=vmem, size = 0x9000, scoped, tag = 'internal scratch']
  %s0 = inlined_call_operand.vmem [shape: f32[8,32], index: 0, kind: input, shape index: {}]
  %s1 = inlined_call_operand.vmem [shape: f32[32,64], index: 1, kind: input, shape index: {}]
  %s2 = inlined_call_operand.vmem [shape: f32[1,64], index: 2, kind: input, shape index: {}]
  %s3 = inlined_call_operand.vmem [shape: f32[64,16], index: 3, kind: input, shape index: {}]
  %s4 = inlined_call_operand.vmem [shape: f32[1,16], index: 4, kind: input, shape index: {}]
  %s5 = inlined_call_operand.hbm [shape: f32[8,16], index: 5, kind: output, shape index: {}]
  %s6 = sld [smem:[#allocation0]]
  $region30: #{tpu_custom_call.1} parent=0
    _
  %s8 = ssub.s32 1, %s6
  %s9 = scalar_select 0, %s8, %s6
  $region1: #{tpu_custom_call.1} parent=0
    #allocation2 [shape = 'u8[4096]{0}', space=vmem, size = 0x1000, scoped, tag = 'output window, operand 0, single buffered']
    #allocation3 [shape = 's32[1]{0}', space=sflag, size = 0x4, scoped, tag = 'scoped memory for tpu_custom_call.1']
    %10 = vsyncpa [#allocation3], 0
    // Predicated region
    $region2: #{tpu_custom_call.1} parent=1 // pred_check
      _
    $region3: #{tpu_custom_call.1} parent=1 // pred_check_branch
      %12 = sbr.rel (0) target = $region5
    $region4: #{tpu_custom_call.1} parent=1 // pred_region
      _
    $region5: #{tpu_custom_call.1} parent=1 // pred_fallthru
      _
    // Predicated region
    $region6: #{tpu_custom_call.1} parent=1 // pred_check
      _
    $region7: #{tpu_custom_call.1} parent=1 // pred_check_branch
      %14 = sbr.rel (0) target = $region9
    $region8: #{tpu_custom_call.1} parent=1 // pred_region
      _
    $region9: #{tpu_custom_call.1} parent=1 // pred_fallthru
      _
    // Predicated region
    $region10: #{tpu_custom_call.1} parent=1 // pred_check
      _
    $region11: #{tpu_custom_call.1} parent=1 // pred_check_branch
      %16 = sbr.rel (0) target = $region13
    $region12: #{tpu_custom_call.1} parent=1 // pred_region
      _
    $region13: #{tpu_custom_call.1} parent=1 // pred_fallthru
      _
    // Predicated region
    $region14: #{tpu_custom_call.1} parent=1 // pred_check
      _
    $region15: #{tpu_custom_call.1} parent=1 // pred_check_branch
      %18 = sbr.rel (0) target = $region17
    $region16: #{tpu_custom_call.1} parent=1 // pred_region
      _
    $region17: #{tpu_custom_call.1} parent=1 // pred_fallthru
      _
    // Predicated region
    $region18: #{tpu_custom_call.1} parent=1 // pred_check
      _
    $region19: #{tpu_custom_call.1} parent=1 // pred_check_branch
      %20 = sbr.rel (0) target = $region21
    $region20: #{tpu_custom_call.1} parent=1 // pred_region
      _
    $region21: #{tpu_custom_call.1} parent=1 // pred_fallthru
      _
    %v21 = vld [vmem:[%s0] sm:$0xff]
    %v22 = vld [vmem:[%s1] sm:$0xff]
    %v23 = vld [vmem:[%s1 + $0x8] sm:$0xff]
    %v24 = vld [vmem:[%s1 + $0x10] sm:$0xff]
    %v25 = vld [vmem:[%s1 + $0x18] sm:$0xff]
    %v26 = vld [vmem:[%s2] sm:$0x1]
    %v28 = vperm.slane %v26, 0
    %vm30 = vcmask 261120
    %v32 = vsel %vm30, %v21, 0
    %34 = vmatpush.msra.mxu0 0.0
    %35 = vmatpush.msra.mxu0 0.0
    %36 = vmatpush.msra.mxu0 0.0
    %37 = vmatpush.msra.mxu0 0.0
    %38 = vmatpush.msra.mxu0 0.0
    %39 = vmatpush.msra.mxu0 0.0
    %40 = vmatpush.msra.mxu0 0.0
    %41 = vmatpush.msra.mxu0 0.0
    %42 = vmatpush.msra.mxu0 0.0
    %43 = vmatpush.msra.mxu0 0.0
    %44 = vmatpush.msra.mxu0 0.0
    %45 = vmatpush.msra.mxu0 0.0
    %46 = vmatpush.msra.mxu0 %v25
    %47 = vmatpush.msra.mxu0 %v24
    %48 = vmatpush.msra.mxu0 %v23
    %49 = vmatpush.msra.mxu0 %v22
    %50 = vmatmul.f32.gmra.mxu0 %v32
    %v51 = vpop.f32.mrf.mxu0
    %v52 = vadd.f32 %v28, %v51
    %53 = vdwg.mxu0
    %v54 = vmax.f32 %v52, 0.0
    %v55 = vld [vmem:[%s3] sm:$0xff]
    %v56 = vld [vmem:[%s3 + $0x8] sm:$0xff]
    %v57 = vld [vmem:[%s3 + $0x10] sm:$0xff]
    %v58 = vld [vmem:[%s3 + $0x18] sm:$0xff]
    %v59 = vld [vmem:[%s3 + $0x20] sm:$0xff]
    %v60 = vld [vmem:[%s3 + $0x28] sm:$0xff]
    %v61 = vld [vmem:[%s3 + $0x30] sm:$0xff]
    %v62 = vld [vmem:[%s3 + $0x38] sm:$0xff]
    %v63 = vld [vmem:[%s4] sm:$0x1]
    %v65 = vperm.slane %v63, 0
    %vm67 = vcmask 523264
    %v69 = vsel %vm67, %v54, 0
    %71 = vmatpush.msra.mxu0 0.0
    %72 = vmatpush.msra.mxu0 0.0
    %73 = vmatpush.msra.mxu0 0.0
    %74 = vmatpush.msra.mxu0 0.0
    %75 = vmatpush.msra.mxu0 0.0
    %76 = vmatpush.msra.mxu0 0.0
    %77 = vmatpush.msra.mxu0 0.0
    %78 = vmatpush.msra.mxu0 0.0
    %79 = vmatpush.msra.mxu0 %v62
    %80 = vmatpush.msra.mxu0 %v61
    %81 = vmatpush.msra.mxu0 %v60
    %82 = vmatpush.msra.mxu0 %v59
    %83 = vmatpush.msra.mxu0 %v58
    %84 = vmatpush.msra.mxu0 %v57
    %85 = vmatpush.msra.mxu0 %v56
    %86 = vmatpush.msra.mxu0 %v55
    %87 = vmatmul.f32.gmra.mxu0 %v69
    %v88 = vpop.f32.mrf.mxu0
    %v89 = vadd.f32 %v65, %v88
    %90 = vdwg.mxu0
    %vm91 = vcmask 130048
    %92 = vst.msk [vmem:[#allocation2] sm:$0xff] %vm91, %v89
    // Predicated region
    $region22: #{tpu_custom_call.1} parent=1 // pred_check
      _
    $region23: #{tpu_custom_call.1} parent=1 // pred_check_branch
      %94 = sbr.rel (0) target = $region25
    $region24: #{tpu_custom_call.1} parent=1 // pred_region
      %96 = vsyncadd [#allocation3], 0
      %s98 = sshll.u32 [#allocation2], 4
      %s99 = int_to_ptr.vmem [resolvable:$true] %s98
      %s100 = sshll.u32 %s5, 4
      %s101 = int_to_ptr.hbm [resolvable:$true] %s100
      %103 = dma.vmem_to_hbm [thread:$0]  %s99, 128, %s101, [#allocation3]
    $region25: #{tpu_custom_call.1} parent=1 // pred_fallthru
      _
    // Predicated region
    $region26: #{tpu_custom_call.1} parent=1 // pred_check
      _
    $region27: #{tpu_custom_call.1} parent=1 // pred_check_branch
      %105 = sbr.rel (0) target = $region29
    $region28: #{tpu_custom_call.1} parent=1 // pred_region
      %107 = dma.done [#allocation3], 128
    $region29: #{tpu_custom_call.1} parent=1 // pred_fallthru
      _
    %108 = vsyncpa [#allocation3], 1

</llo_original>
